<compile_context>
chip_gen: v7x
topology: tpu7x:2x2x1
jax: 0.10.0
libtpu: 0.0.40
codegen_flags: <defaults>
</compile_context>

<pallas_src>
import functools

import jax
import jax.numpy as jnp
from jax import lax
from jax.experimental import pallas as pl
from jax.experimental.pallas import tpu as pltpu

_T_TILE_DEFAULT = 1024  # lane-dense time tile (multiple of 128)


def _round_up(x, m):
    return ((x + m - 1) // m) * m


def _spec_augment_kernel(xlen_ref, fs_ref, fw_ref, ts_ref, tw_ref,
                         x_ref, o_ref, *, mask_value, n_freq_masks,
                         n_time_masks, t_tile):
    """Masks one (F, T_TILE) tile of one batch element.

    Semantics match the Numba CUDA kernel:
      - freq masks zero rows f in [f_start, f_start + f_width) everywhere
      - time masks zero cols t in [t_start, t_start + t_width) but only for
        t < x_len[b] (valid, un-padded region)
    """
    b = pl.program_id(0)
    t_blk = pl.program_id(1)
    F, T_TILE = x_ref.shape

    # ---- frequency masks: (F, 1) column, sublane iota --------------------
    f_idx = lax.broadcasted_iota(jnp.int32, (F, 1), 0)
    freq_mask = jnp.zeros((F, 1), dtype=jnp.bool_)
    for m in range(n_freq_masks):
        f_start = fs_ref[b * n_freq_masks + m]
        f_width = fw_ref[b * n_freq_masks + m]
        freq_mask = freq_mask | ((f_idx >= f_start) &
                                 (f_idx < f_start + f_width))

    # ---- time masks: (1, T_TILE) row, lane iota + global tile offset -----
    t_idx = lax.broadcasted_iota(jnp.int32, (1, T_TILE), 1) + t_blk * t_tile
    time_mask = jnp.zeros((1, T_TILE), dtype=jnp.bool_)
    for m in range(n_time_masks):
        t_start = ts_ref[b * n_time_masks + m]
        t_width = tw_ref[b * n_time_masks + m]
        time_mask = time_mask | ((t_idx >= t_start) &
                                 (t_idx < t_start + t_width))
    # xlen gate hoisted out of the loop (OR distributes over the constant AND).
    time_mask = time_mask & (t_idx < xlen_ref[b])

    # Single broadcast OR + single select over the full tile (scalar operand).
    mask = freq_mask | time_mask                       # -> (F, T_TILE)
    x = x_ref[...]
    o_ref[...] = jnp.where(mask, jnp.asarray(mask_value, x.dtype), x)


def launch_spec_augment_pallas(x, x_len, freq_starts, freq_lengths,
                               time_starts, time_lengths, freq_masks,
                               time_masks, mask_value, t_tile=None):
    """Pallas analogue of launch_spec_augment_kernel. x: [B, F, T] float."""
    if freq_masks <= 0 and time_masks <= 0:
        return x

    B, F, T = x.shape
    n_f = int(freq_starts.shape[1])
    n_t = int(time_starts.shape[1])

    # Lane-dense time tiling: tile is a multiple of 128; pad T up to a tile
    # multiple (caller-side padding keeps stores unmasked / lane-dense).
    if t_tile is None:
        t_tile = min(_T_TILE_DEFAULT, _round_up(T, 128))
    t_tile = _round_up(t_tile, 128)
    T_pad = _round_up(T, t_tile)
    x_p = x if T_pad == T else jnp.pad(x, ((0, 0), (0, 0), (0, T_pad - T)))

    # Flattened 1-D int32 SMEM tables (avoids 2-D SMEM padding blow-up).
    xlen_i32 = x_len.astype(jnp.int32).reshape(B)
    fs = freq_starts.astype(jnp.int32).reshape(B * n_f)
    fw = freq_lengths.astype(jnp.int32).reshape(B * n_f)
    ts = time_starts.astype(jnp.int32).reshape(B * n_t)
    tw = time_lengths.astype(jnp.int32).reshape(B * n_t)

    kernel = functools.partial(
        _spec_augment_kernel,
        mask_value=float(mask_value),
        n_freq_masks=n_f,
        n_time_masks=n_t,
        t_tile=t_tile,
    )

    out = pl.pallas_call(
        kernel,
        out_shape=jax.ShapeDtypeStruct((B, F, T_pad), x.dtype),
        grid_spec=pltpu.PrefetchScalarGridSpec(
            num_scalar_prefetch=5,            # x_len, fs, fw, ts, tw -> SMEM
            grid=(B, T_pad // t_tile),
            in_specs=[pl.BlockSpec((pl.Squeezed(), F, t_tile),
                                   lambda b, t, *_: (b, 0, t))],
            out_specs=pl.BlockSpec((pl.Squeezed(), F, t_tile),
                                   lambda b, t, *_: (b, 0, t)),
        ),
        compiler_params=pltpu.CompilerParams(
            dimension_semantics=("parallel", "parallel")),
    )(xlen_i32, fs, fw, ts, tw, x_p)

    if T_pad != T:
        out = out[:, :, :T]
    return out


class SpecAugmentPallas:
    """JAX/Pallas re-implementation of SpecAugmentNumba's forward pass."""

    def __init__(self, freq_masks=0, time_masks=0, freq_width=10,
                 time_width=0.1, mask_value=0.0):
        self.freq_masks = freq_masks
        self.time_masks = time_masks
        self.freq_width = freq_width
        self.time_width = time_width
        self.mask_value = mask_value
        if isinstance(time_width, int):
            self.adaptive_temporal_width = False
        else:
            if time_width > 1.0 or time_width < 0.0:
                raise ValueError(
                    "If `time_width` is a float value, must be in range [0, 1]")
            self.adaptive_temporal_width = True

    def __call__(self, input_spec, length, key):
        """input_spec: [B, F, T] float, length: [B] int, key: PRNGKey."""
        B, F, T = input_spec.shape
        k_fs, k_fw, k_ts, k_tw = jax.random.split(key, 4)

        if self.freq_masks > 0:
            # Guard against freq_width > F producing an invalid randint range.
            fs_maxval = max(1, F - self.freq_width + 1)
            freq_starts = jax.random.randint(
                k_fs, (B, self.freq_masks), 0, fs_maxval)
            freq_lengths = jax.random.randint(
                k_fw, (B, self.freq_masks), 0, self.freq_width + 1)
        else:
            freq_starts = jnp.zeros((B, 1), dtype=jnp.int32)
            freq_lengths = jnp.zeros((B, 1), dtype=jnp.int32)

        if self.time_masks > 0:
            if self.adaptive_temporal_width:
                time_width = jnp.maximum(
                    (length.astype(jnp.float32) * self.time_width)
                    .astype(jnp.int32), 1)
            else:
                time_width = jnp.full((B,), self.time_width, dtype=jnp.int32)
            max_start = jnp.maximum(1, length.astype(jnp.int32) - time_width)
            time_starts = jax.random.randint(
                k_ts, (B, self.time_masks), 0, max_start[:, None])
            time_lengths = jax.random.randint(
                k_tw, (B, self.time_masks), 0, (time_width + 1)[:, None])
        else:
            time_starts = jnp.zeros((B, 1), dtype=jnp.int32)
            time_lengths = jnp.zeros((B, 1), dtype=jnp.int32)

        return launch_spec_augment_pallas(
            input_spec, length, freq_starts, freq_lengths, time_starts,
            time_lengths, self.freq_masks, self.time_masks, self.mask_value)


def _reference_spec_augment(x, x_len, fs, fw, ts, tw, mask_value):
    """Pure-JAX reference (same semantics as the Numba kernel)."""
    B, F, T = x.shape
    f_idx = jnp.arange(F)[None, :, None]                       # [1, F, 1]
    t_idx = jnp.arange(T)[None, None, :]                       # [1, 1, T]
    freq_mask = jnp.any(
        (f_idx[:, :, :, None] >= fs[:, None, None, :])
        & (f_idx[:, :, :, None] < (fs + fw)[:, None, None, :]), axis=-1)
    time_mask = jnp.any(
        (t_idx[:, :, :, None] >= ts[:, None, None, :])
        & (t_idx[:, :, :, None] < (ts + tw)[:, None, None, :]), axis=-1)
    time_mask = time_mask & (t_idx < x_len[:, None, None])
    mask = freq_mask | time_mask
    return jnp.where(mask, jnp.asarray(mask_value, x.dtype), x)


if __name__ == "__main__":
    key = jax.random.PRNGKey(0)
    k_x, k_masks, k_fs, k_fw, k_ts, k_tw, k_x2 = jax.random.split(key, 7)

    # ---- Test 1: kernel vs pure-JAX reference with explicit mask tables ----
    B, F, T = 2, 16, 32
    x = jax.random.normal(k_x, (B, F, T), dtype=jnp.float32)
    length = jnp.array([32, 24], dtype=jnp.int32)

    freq_masks, time_masks, freq_width = 2, 2, 4
    tw_arr = jnp.maximum((length.astype(jnp.float32) * 0.25).astype(jnp.int32), 1)
    fs = jax.random.randint(k_fs, (B, freq_masks), 0, F - freq_width + 1)
    fw = jax.random.randint(k_fw, (B, freq_masks), 0, freq_width + 1)
    ts = jax.random.randint(k_ts, (B, time_masks), 0,
                            jnp.maximum(1, length - tw_arr)[:, None])
    tw = jax.random.randint(k_tw, (B, time_masks), 0, (tw_arr + 1)[:, None])

    out = launch_spec_augment_pallas(x, length, fs, fw, ts, tw,
                                     freq_masks, time_masks, 0.0)
    out = jax.block_until_ready(out)
    ref = _reference_spec_augment(x, length, fs, fw, ts, tw, 0.0)
    assert out.shape == x.shape and out.dtype == x.dtype
    assert jnp.allclose(out, ref), "Pallas output mismatch vs reference (T=32)"

    # ---- Test 2: exercise the multi-tile time axis (forced small t_tile) ---
    T2 = 256
    x2 = jax.random.normal(k_x2, (B, F, T2), dtype=jnp.float32)
    length2 = jnp.array([256, 180], dtype=jnp.int32)
    tw_arr2 = jnp.maximum((length2.astype(jnp.float32) * 0.1).astype(jnp.int32), 1)
    ts2 = jax.random.randint(k_ts, (B, time_masks), 0,
                             jnp.maximum(1, length2 - tw_arr2)[:, None])
    tw2 = jax.random.randint(k_tw, (B, time_masks), 0, (tw_arr2 + 1)[:, None])
    out2 = launch_spec_augment_pallas(x2, length2, fs, fw, ts2, tw2,
                                      freq_masks, time_masks, 0.0, t_tile=128)
    out2 = jax.block_until_ready(out2)
    ref2 = _reference_spec_augment(x2, length2, fs, fw, ts2, tw2, 0.0)
    assert jnp.allclose(out2, ref2), "Pallas output mismatch vs reference (tiled T)"

    # ---- Test 3: full module path (RNG + kernel) ----------------------------
    module = SpecAugmentPallas(freq_masks=2, time_masks=2, freq_width=4,
                               time_width=0.25, mask_value=0.0)
    out3 = jax.block_until_ready(module(x, length, k_masks))
    assert out3.shape == x.shape and out3.dtype == x.dtype

    print("KERNEL_OK")
</pallas_src>

<mosaic_0001>
module attributes {stable_mosaic.version = 11 : i64} {
  func.func @_spec_augment_kernel(%arg0: i32, %arg1: i32, %arg2: memref<2xi32, #tpu.memory_space<smem>>, %arg3: memref<4xi32, #tpu.memory_space<smem>>, %arg4: memref<4xi32, #tpu.memory_space<smem>>, %arg5: memref<4xi32, #tpu.memory_space<smem>>, %arg6: memref<4xi32, #tpu.memory_space<smem>>, %arg7: memref<1x16x128xf32, #tpu.memory_space<vmem>>, %arg8: memref<1x16x128xf32, #tpu.memory_space<vmem>>) attributes {dimension_semantics = [#tpu.dimension_semantics<parallel>, #tpu.dimension_semantics<parallel>], iteration_bounds = array<i64: 2, 1>, scalar_prefetch = 5 : i64, scratch_operands = 0 : i64, tpu.core_type = #tpu.core_type<tc>, window_params = [{transform_indices = @transform_0, window_bounds = array<i64: 1, 16, 128>}, {transform_indices = @transform_1, window_bounds = array<i64: 1, 16, 128>}]} {
    %0 = tpu.iota {dimensions = array<i32: 0>} : vector<16x1xi32>
    %false = arith.constant false
    %1 = vector.broadcast %false : i1 to vector<16x1xi1>
    %c2_i32 = arith.constant 2 : i32
    %2 = arith.muli %arg0, %c2_i32 : i32
    %c0_i32 = arith.constant 0 : i32
    %3 = arith.addi %2, %c0_i32 : i32
    %4 = arith.index_cast %3 : i32 to index
    %5 = memref.load %arg3[%4] : memref<4xi32, #tpu.memory_space<smem>>
    %c2_i32_0 = arith.constant 2 : i32
    %6 = arith.muli %arg0, %c2_i32_0 : i32
    %c0_i32_1 = arith.constant 0 : i32
    %7 = arith.addi %6, %c0_i32_1 : i32
    %8 = arith.index_cast %7 : i32 to index
    %9 = memref.load %arg4[%8] : memref<4xi32, #tpu.memory_space<smem>>
    %10 = vector.broadcast %5 : i32 to vector<16x1xi32>
    %11 = arith.cmpi sge, %0, %10 : vector<16x1xi32>
    %12 = arith.addi %5, %9 : i32
    %13 = vector.broadcast %12 : i32 to vector<16x1xi32>
    %14 = arith.cmpi slt, %0, %13 : vector<16x1xi32>
    %15 = arith.andi %11, %14 : vector<16x1xi1>
    %16 = arith.ori %1, %15 : vector<16x1xi1>
    %c2_i32_2 = arith.constant 2 : i32
    %17 = arith.muli %arg0, %c2_i32_2 : i32
    %c1_i32 = arith.constant 1 : i32
    %18 = arith.addi %17, %c1_i32 : i32
    %19 = arith.index_cast %18 : i32 to index
    %20 = memref.load %arg3[%19] : memref<4xi32, #tpu.memory_space<smem>>
    %c2_i32_3 = arith.constant 2 : i32
    %21 = arith.muli %arg0, %c2_i32_3 : i32
    %c1_i32_4 = arith.constant 1 : i32
    %22 = arith.addi %21, %c1_i32_4 : i32
    %23 = arith.index_cast %22 : i32 to index
    %24 = memref.load %arg4[%23] : memref<4xi32, #tpu.memory_space<smem>>
    %25 = vector.broadcast %20 : i32 to vector<16x1xi32>
    %26 = arith.cmpi sge, %0, %25 : vector<16x1xi32>
    %27 = arith.addi %20, %24 : i32
    %28 = vector.broadcast %27 : i32 to vector<16x1xi32>
    %29 = arith.cmpi slt, %0, %28 : vector<16x1xi32>
    %30 = arith.andi %26, %29 : vector<16x1xi1>
    %31 = arith.ori %16, %30 : vector<16x1xi1>
    %32 = tpu.iota {dimensions = array<i32: 1>} : vector<1x128xi32>
    %c128_i32 = arith.constant 128 : i32
    %33 = arith.muli %arg1, %c128_i32 : i32
    %34 = vector.broadcast %33 : i32 to vector<1x128xi32>
    %35 = arith.addi %32, %34 : vector<1x128xi32>
    %false_5 = arith.constant false
    %36 = vector.broadcast %false_5 : i1 to vector<1x128xi1>
    %c2_i32_6 = arith.constant 2 : i32
    %37 = arith.muli %arg0, %c2_i32_6 : i32
    %c0_i32_7 = arith.constant 0 : i32
    %38 = arith.addi %37, %c0_i32_7 : i32
    %39 = arith.index_cast %38 : i32 to index
    %40 = memref.load %arg5[%39] : memref<4xi32, #tpu.memory_space<smem>>
    %c2_i32_8 = arith.constant 2 : i32
    %41 = arith.muli %arg0, %c2_i32_8 : i32
    %c0_i32_9 = arith.constant 0 : i32
    %42 = arith.addi %41, %c0_i32_9 : i32
    %43 = arith.index_cast %42 : i32 to index
    %44 = memref.load %arg6[%43] : memref<4xi32, #tpu.memory_space<smem>>
    %45 = vector.broadcast %40 : i32 to vector<1x128xi32>
    %46 = arith.cmpi sge, %35, %45 : vector<1x128xi32>
    %47 = arith.addi %40, %44 : i32
    %48 = vector.broadcast %47 : i32 to vector<1x128xi32>
    %49 = arith.cmpi slt, %35, %48 : vector<1x128xi32>
    %50 = arith.andi %46, %49 : vector<1x128xi1>
    %51 = arith.ori %36, %50 : vector<1x128xi1>
    %c2_i32_10 = arith.constant 2 : i32
    %52 = arith.muli %arg0, %c2_i32_10 : i32
    %c1_i32_11 = arith.constant 1 : i32
    %53 = arith.addi %52, %c1_i32_11 : i32
    %54 = arith.index_cast %53 : i32 to index
    %55 = memref.load %arg5[%54] : memref<4xi32, #tpu.memory_space<smem>>
    %c2_i32_12 = arith.constant 2 : i32
    %56 = arith.muli %arg0, %c2_i32_12 : i32
    %c1_i32_13 = arith.constant 1 : i32
    %57 = arith.addi %56, %c1_i32_13 : i32
    %58 = arith.index_cast %57 : i32 to index
    %59 = memref.load %arg6[%58] : memref<4xi32, #tpu.memory_space<smem>>
    %60 = vector.broadcast %55 : i32 to vector<1x128xi32>
    %61 = arith.cmpi sge, %35, %60 : vector<1x128xi32>
    %62 = arith.addi %55, %59 : i32
    %63 = vector.broadcast %62 : i32 to vector<1x128xi32>
    %64 = arith.cmpi slt, %35, %63 : vector<1x128xi32>
    %65 = arith.andi %61, %64 : vector<1x128xi1>
    %66 = arith.ori %51, %65 : vector<1x128xi1>
    %67 = arith.index_cast %arg0 : i32 to index
    %68 = memref.load %arg2[%67] : memref<2xi32, #tpu.memory_space<smem>>
    %69 = vector.broadcast %68 : i32 to vector<1x128xi32>
    %70 = arith.cmpi slt, %35, %69 : vector<1x128xi32>
    %71 = arith.andi %66, %70 : vector<1x128xi1>
    %72 = vector.broadcast %31 : vector<16x1xi1> to vector<16x128xi1>
    %73 = vector.broadcast %71 : vector<1x128xi1> to vector<16x128xi1>
    %74 = arith.ori %72, %73 : vector<16x128xi1>
    %c0 = arith.constant 0 : index
    %c0_14 = arith.constant 0 : index
    %c0_15 = arith.constant 0 : index
    %75 = vector.load %arg7[%c0, %c0_14, %c0_15] : memref<1x16x128xf32, #tpu.memory_space<vmem>>, vector<1x16x128xf32>
    %76 = vector.shape_cast %75 : vector<1x16x128xf32> to vector<16x128xf32>
    %cst = arith.constant 0.000000e+00 : f32
    %77 = vector.broadcast %cst : f32 to vector<16x128xf32>
    %78 = arith.select %74, %77, %76 : vector<16x128xi1>, vector<16x128xf32>
    %c0_16 = arith.constant 0 : index
    %c0_17 = arith.constant 0 : index
    %c0_18 = arith.constant 0 : index
    %79 = vector.load %arg8[%c0_16, %c0_17, %c0_18] : memref<1x16x128xf32, #tpu.memory_space<vmem>>, vector<1x16x128xf32>
    %80 = vector.shape_cast %79 : vector<1x16x128xf32> to vector<16x128xf32>
    %81 = vector.shape_cast %78 : vector<16x128xf32> to vector<1x16x128xf32>
    tpu.vector_store %arg8[%c0_16, %c0_17, %c0_18], %81 {strides = array<i32>} : memref<1x16x128xf32, #tpu.memory_space<vmem>>, vector<1x16x128xf32>,
    return
  }
  func.func @transform_0(%arg0: i32, %arg1: i32, %arg2: memref<2xi32, #tpu.memory_space<smem>>, %arg3: memref<4xi32, #tpu.memory_space<smem>>, %arg4: memref<4xi32, #tpu.memory_space<smem>>, %arg5: memref<4xi32, #tpu.memory_space<smem>>, %arg6: memref<4xi32, #tpu.memory_space<smem>>) -> (i32, i32, i32) {
    %c0_i32 = arith.constant 0 : i32
    %c0_i32_0 = arith.constant 0 : i32
    return %arg0, %c0_i32, %arg1 : i32, i32, i32
  }
  func.func @transform_1(%arg0: i32, %arg1: i32, %arg2: memref<2xi32, #tpu.memory_space<smem>>, %arg3: memref<4xi32, #tpu.memory_space<smem>>, %arg4: memref<4xi32, #tpu.memory_space<smem>>, %arg5: memref<4xi32, #tpu.memory_space<smem>>, %arg6: memref<4xi32, #tpu.memory_space<smem>>) -> (i32, i32, i32) {
    %c0_i32 = arith.constant 0 : i32
    %c0_i32_0 = arith.constant 0 : i32
    return %arg0, %c0_i32, %arg1 : i32, i32, i32
  }
}

</mosaic_0001>

<llo_original>
// kernel: tpu_custom_call.1
$region0: #{tpu_custom_call.1}
  #allocation0 [shape = 'u32[]', space=smem, size = 0x4, offset = 0x4, fixed_abs, tag = 'smem constant byte address 0x4 - core index']
  #allocation1 [shape = 'u32[144,128]{1,0:T(1,128)}', space=vmem, size = 0x12000, scoped, tag = 'internal scratch']
  #allocation2 [shape = 's32[1]{0}', space=sflag, size = 0x4, scoped, tag = 'scoped memory for tpu_custom_call.1']
  #allocation3 [shape = 'u8[512]{0}', space=smem, size = 0x200, scoped, tag = 'prefetched SMEM operand 0']
  #allocation4 [shape = 'u8[512]{0}', space=smem, size = 0x200, scoped, tag = 'prefetched SMEM operand 1']
  #allocation5 [shape = 'u8[512]{0}', space=smem, size = 0x200, scoped, tag = 'prefetched SMEM operand 2']
  #allocation6 [shape = 'u8[512]{0}', space=smem, size = 0x200, scoped, tag = 'prefetched SMEM operand 3']
  #allocation7 [shape = 'u8[512]{0}', space=smem, size = 0x200, scoped, tag = 'prefetched SMEM operand 4']
  %s0 = inlined_call_operand.hbm [shape: s32[2], index: 0, kind: input, shape index: {}]
  %s1 = inlined_call_operand.vmem [shape: s32[4], index: 1, kind: input, shape index: {}]
  %s2 = inlined_call_operand.vmem [shape: s32[4], index: 2, kind: input, shape index: {}]
  %s3 = inlined_call_operand.vmem [shape: s32[4], index: 3, kind: input, shape index: {}]
  %s4 = inlined_call_operand.vmem [shape: s32[4], index: 4, kind: input, shape index: {}]
  %s5 = inlined_call_operand.hbm [shape: f32[2,16,128], index: 5, kind: input, shape index: {}]
  %s6 = inlined_call_operand.hbm [shape: f32[2,16,128], index: 6, kind: output, shape index: {}]
  %s7 = sld [smem:[#allocation0]]
  $region41: #{tpu_custom_call.1} parent=0
    _
  %s9 = ssub.s32 1, %s7
  %s10 = scalar_select 0, %s9, %s7
  %12 = dma.hbm_to_smem %s0, 16, [#allocation3], [#allocation2]
  %s13 = sshll.u32 %s1, 4
  %s14 = int_to_ptr.vmem [resolvable:$true] %s13
  %16 = dma.vmem_to_smem %s14, 16, [#allocation4], [#allocation2]
  %s17 = sshll.u32 %s2, 4
  %s18 = int_to_ptr.vmem [resolvable:$true] %s17
  %20 = dma.vmem_to_smem %s18, 16, [#allocation5], [#allocation2]
  %s21 = sshll.u32 %s3, 4
  %s22 = int_to_ptr.vmem [resolvable:$true] %s21
  %24 = dma.vmem_to_smem %s22, 16, [#allocation6], [#allocation2]
  %s25 = sshll.u32 %s4, 4
  %s26 = int_to_ptr.vmem [resolvable:$true] %s25
  %28 = dma.vmem_to_smem %s26, 16, [#allocation7], [#allocation2]
  %29 = dma.done [#allocation2], 80
  %30 = sfence
  $region1: #{tpu_custom_call.1} parent=0
    #allocation8 [shape = 'u8[16384]{0}', space=vmem, size = 0x4000, scoped, tag = 'input window, operand 5']
    #allocation9 [shape = 's32[2]{0}', space=sflag, size = 0x8, scoped, tag = 'scoped memory for tpu_custom_call.1']
    #allocation10 [shape = 's32[2]{0}', space=sflag, size = 0x8, scoped, tag = 'scoped memory for tpu_custom_call.1']
    #allocation11 [shape = 'u8[16384]{0}', space=vmem, size = 0x4000, scoped, tag = 'output window, operand 0']
    %31 = vsyncpa [#allocation9], 0
    %s32 = scalar_lea.sflag [#allocation9], 1
    %33 = vsyncpa %s32, 0
    %34 = vsyncpa [#allocation10], 0
    %s35 = scalar_lea.sflag [#allocation10], 1
    %36 = vsyncpa %s35, 0
    loop: start=0, step=1, limit=4
    $region2: #{tpu_custom_call.1} parent=1 // loop_pre_header
      _
    $region3: #{tpu_custom_call.1} parent=1 // loop_header
      %s38 = sphi 0, %s42
      %p39 = scmp.ge.s32.totalorder %s38, 4
      %s45 = sphi 0, %s57
      %s46 = sphi 0, %s53
      %s47 = sphi 0, %s45
      %s48 = sphi 0, %s46
      %s49 = sphi 0, %s47
      %s50 = sphi 0, %s48
      %s62 = sphi 0, %s64
      %s65 = sphi 0, %s62
      %s66 = sphi 0, %s65
      %s82 = sphi 0, %s66
      %s90 = sphi 0, %s92
      %s93 = sphi 0, %s90
      %s94 = sphi 0, %s93
      %s110 = sphi 0, %s94
    $region4: #{tpu_custom_call.1} parent=1 // loop_header_branch
      %41 = sbr.rel (%p39) target = $region8
    $region5: #{tpu_custom_call.1} parent=1 // loop_body
      %s43 = ssub.s32 %s38, 1
      %s44 = ssub.s32 %s38, 2
      %s51 = sadd.s32 1, %s46
      %p52 = scmp.ge.s32.totalorder %s51, 1
      %s53 = scalar_select %p52, 0, %s51
      %s54 = sadd.s32 1, %s45
      %s55 = scalar_select %p52, %s54, %s45
      %p56 = scmp.ge.s32.totalorder %s55, 2
      %s57 = scalar_select %p56, 0, %s55
      %s58 = ssub.s32 %s45, %s57
      %s59 = ssub.s32 %s46, %s53
      %s60 = sor.u32 %s58, %s59
      %p61 = scmp.eq.s32.totalorder %s60, 0
      %s63 = sadd.s32 %s62, 1
      %s64 = scalar_select %p61, %s62, %s63
      %p67 = pneg %p61
      %p68 = scmp.eq.s32.totalorder %s38, 1
      %p69 = por %p67, %p68
      %p70 = scmp.ne.s32.totalorder %s62, %s65
      %p71 = scmp.eq.s32.totalorder %s38, 0
      %p72 = por %p70, %p71
      %p73 = scmp.ne.s32.totalorder %s62, %s65
      %p74 = scmp.eq.s32.totalorder %s43, 1
      %p75 = por %p73, %p74
      %p76 = scmp.ne.s32.totalorder %s65, %s66
      %p77 = scmp.eq.s32.totalorder %s43, 0
      %p78 = por %p76, %p77
      %p79 = scmp.ne.s32.totalorder %s65, %s66
      %p80 = scmp.eq.s32.totalorder %s44, 1
      %p81 = por %p79, %p80
      %p83 = scmp.ne.s32.totalorder %s66, %s82
      %p84 = scmp.eq.s32.totalorder %s44, 0
      %p85 = por %p83, %p84
      %s86 = ssub.s32 %s45, %s57
      %s87 = ssub.s32 %s46, %s53
      %s88 = sor.u32 %s86, %s87
      %p89 = scmp.eq.s32.totalorder %s88, 0
      %s91 = sadd.s32 %s90, 1
      %s92 = scalar_select %p89, %s90, %s91
      %p95 = pneg %p89
      %p96 = scmp.eq.s32.totalorder %s38, 1
      %p97 = por %p95, %p96
      %p98 = scmp.ne.s32.totalorder %s90, %s93
      %p99 = scmp.eq.s32.totalorder %s38, 0
      %p100 = por %p98, %p99
      %p101 = scmp.ne.s32.totalorder %s90, %s93
      %p102 = scmp.eq.s32.totalorder %s43, 1
      %p103 = por %p101, %p102
      %p104 = scmp.ne.s32.totalorder %s93, %s94
      %p105 = scmp.eq.s32.totalorder %s43, 0
      %p106 = por %p104, %p105
      %p107 = scmp.ne.s32.totalorder %s93, %s94
      %p108 = scmp.eq.s32.totalorder %s44, 1
      %p109 = por %p107, %p108
      %p111 = scmp.ne.s32.totalorder %s94, %s110
      %p112 = scmp.eq.s32.totalorder %s44, 0
      %p113 = por %p111, %p112
      %p114 = scmp.le.s32.totalorder 1, %s38
      %p115 = scmp.lt.s32.totalorder %s38, 3
      %p116 = pnand %p114, %p115
      %p117 = pneg %p116
      // Predicated region
      $region9: #{tpu_custom_call.1} parent=5 // pred_check
        _
      $region10: #{tpu_custom_call.1} parent=5 // pred_check_branch
        %119 = sbr.rel (%p116) target = $region12
      $region11: #{tpu_custom_call.1} parent=5 // pred_region
        %s120 = ssub.s32 %s38, 1
      $region12: #{tpu_custom_call.1} parent=5 // pred_fallthru
        _
      %p121 = scmp.lt.s32.totalorder %s38, 2
      // Predicated region
      $region13: #{tpu_custom_call.1} parent=5 // pred_check
        %p122 = pneg %p121
      $region14: #{tpu_custom_call.1} parent=5 // pred_check_branch
        %124 = sbr.rel (%p122) target = $region16
      $region15: #{tpu_custom_call.1} parent=5 // pred_region
        // Predicated region
        $region17: #{tpu_custom_call.1} parent=15 // pred_check
          %p125 = pneg %p72
        $region18: #{tpu_custom_call.1} parent=15 // pred_check_branch
          %127 = sbr.rel (%p125) target = $region20
        $region19: #{tpu_custom_call.1} parent=15 // pred_region
          %s128 = sand.u32 %s62, 1
          %s129 = scalar_lea.sflag [#allocation9], %s128
          %s130 = sand.u32 %s62, 1
          %s131 = smul.addr %s130, 16
          %s132 = scalar_lea.vmem [#allocation8], %s131
          %s134 = ssub.s32 256, 256
          %135 = vsyncadd %s129, %s134
          %s136 = smul.addr %s45, 2
          %s137 = sadd.s32 %s46, %s136
          %s138 = smul.addr %s137, 128
          %s139 = scalar_lea.hbm %s5, %s138
          %s140 = sshll.u32 %s132, 4
          %s141 = int_to_ptr.vmem [resolvable:$true] %s140
          %146 = dma.hbm_to_vmem [thread:$0]  %s139, 256, %s141, %s129, 128, 128, 8
        $region20: #{tpu_custom_call.1} parent=15 // pred_fallthru
          _
      $region16: #{tpu_custom_call.1} parent=5 // pred_fallthru
        _
      %p147 = scmp.le.s32.totalorder 1, %s38
      %p148 = scmp.lt.s32.totalorder %s38, 3
      %p149 = pnand %p147, %p148
      %p150 = pneg %p149
      // Predicated region
      $region21: #{tpu_custom_call.1} parent=5 // pred_check
        _
      $region22: #{tpu_custom_call.1} parent=5 // pred_check_branch
        %152 = sbr.rel (%p149) target = $region24
      $region23: #{tpu_custom_call.1} parent=5 // pred_region
        %s153 = ssub.s32 %s38, 1
        %s154 = sand.u32 %s65, 1
        %s155 = scalar_lea.sflag [#allocation9], %s154
        %s156 = sand.u32 %s65, 1
        %s157 = smul.addr %s156, 16
        %s158 = scalar_lea.vmem [#allocation8], %s157
        // Predicated region
        $region25: #{tpu_custom_call.1} parent=23 // pred_check
          %p159 = pneg %p78
        $region26: #{tpu_custom_call.1} parent=23 // pred_check_branch
          %161 = sbr.rel (%p159) target = $region28
        $region27: #{tpu_custom_call.1} parent=23 // pred_region
          %162 = dma.done %s155, 256
        $region28: #{tpu_custom_call.1} parent=23 // pred_fallthru
          _
        %s163 = sand.u32 %s65, 1
        %s164 = scalar_lea.sflag [#allocation9], %s163
        %s165 = sand.u32 %s65, 1
        %s166 = smul.addr %s165, 16
        %s167 = scalar_lea.vmem [#allocation8], %s166
        %p168 = pneg %p78
        %p169 = pneg %p75
        %p170 = pneg %p106
        %p171 = pneg %p103
        %s172 = sand.u32 %s93, 1
        %s173 = scalar_lea.sflag [#allocation10], %s172
        %s174 = sand.u32 %s93, 1
        %s175 = smul.addr %s174, 16
        %s176 = scalar_lea.vmem [#allocation11], %s175
        %v177 = vlaneseq
        %v178 = vshrl.u32 %v177, 7
        %v179 = vadd.s32 %v178, 8
        %s180 = smul.u32 %s47, 2
        %s181 = sld [smem:[#allocation4 + %s180]]
        %s182 = sld [smem:[#allocation5 + %s180]]
        %v183 = vstv %s181
        %vm184 = vcmp.ge.s32.totalorder %v178, %v183
        %vm185 = vcmp.ge.s32.totalorder %v179, %v183
        %s186 = sadd.s32 %s181, %s182
        %v187 = vstv %s186
        %vm188 = vcmp.lt.s32.totalorder %v178, %v187
        %vm189 = vcmp.lt.s32.totalorder %v179, %v187
        %vm190 = vmand %vm184, %vm188
        %vm191 = vmand %vm185, %vm189
        %s192 = sadd.s32 %s180, 1
        %s193 = sld [smem:[#allocation4 + %s192]]
        %s194 = sld [smem:[#allocation5 + %s192]]
        %v195 = vstv %s193
        %vm196 = vcmp.ge.s32.totalorder %v178, %v195
        %vm197 = vcmp.ge.s32.totalorder %v179, %v195
        %s198 = sadd.s32 %s193, %s194
        %v199 = vstv %s198
        %vm200 = vcmp.lt.s32.totalorder %v178, %v199
        %vm201 = vcmp.lt.s32.totalorder %v179, %v199
        %vm202 = vmand %vm196, %vm200
        %vm203 = vmand %vm197, %vm201
        %vm204 = vmor %vm190, %vm202
        %vm205 = vmor %vm191, %vm203
        %v206 = vlaneseq
        %v207 = vand.u32 %v206, 127
        %s208 = smul.u32 %s48, 128
        %v209 = vstv %s208
        %v210 = vadd.s32 %v207, %v209
        %s211 = sld [smem:[#allocation6 + %s180]]
        %s212 = sld [smem:[#allocation7 + %s180]]
        %v213 = vstv %s211
        %vm214 = vcmp.ge.s32.totalorder %v210, %v213
        %s215 = sadd.s32 %s211, %s212
        %v216 = vstv %s215
        %vm217 = vcmp.lt.s32.totalorder %v210, %v216
        %vm218 = vmand %vm214, %vm217
        %s219 = sld [smem:[#allocation6 + %s192]]
        %s220 = sld [smem:[#allocation7 + %s192]]
        %v221 = vstv %s219
        %vm222 = vcmp.ge.s32.totalorder %v210, %v221
        %s223 = sadd.s32 %s219, %s220
        %v224 = vstv %s223
        %vm225 = vcmp.lt.s32.totalorder %v210, %v224
        %vm226 = vmand %vm222, %vm225
        %vm227 = vmor %vm218, %vm226
        %s228 = sld [smem:[#allocation3 + %s47]]
        %v229 = vstv %s228
        %vm230 = vcmp.lt.s32.totalorder %v210, %v229
        %vm231 = vmand %vm227, %vm230
        %v232 = vsel %vm204, 1, 0
        %v233 = vsel %vm205, 1, 0
        %vm234 = vcmp.eq.s32.totalorder %v232, 1
        %vm235 = vcmp.eq.s32.totalorder %v233, 1
        %v236 = vsel %vm231, 1, 0
        %vm237 = vcmp.eq.s32.totalorder %v236, 1
        %vm238 = vmor %vm234, %vm237
        %vm239 = vmor %vm235, %vm237
        %v240 = vld [vmem:[%s158] sm:$0xff]
        %v241 = vld [vmem:[%s158 + $0x8] sm:$0xff]
        %v242 = vsel %vm238, 0.0, %v240
        %v243 = vsel %vm239, 0.0, %v241
        %244 = vst [vmem:[%s176] sm:$0xff] %v242
        %245 = vst [vmem:[%s176 + $0x8] sm:$0xff] %v243
        %s246 = sand.u32 %s93, 1
        %s247 = scalar_lea.sflag [#allocation10], %s246
        %s248 = sand.u32 %s93, 1
        %s249 = smul.addr %s248, 16
        %s250 = scalar_lea.vmem [#allocation11], %s249
        // Predicated region
        $region29: #{tpu_custom_call.1} parent=23 // pred_check
          %p251 = pneg %p103
        $region30: #{tpu_custom_call.1} parent=23 // pred_check_branch
          %253 = sbr.rel (%p251) target = $region32
        $region31: #{tpu_custom_call.1} parent=23 // pred_region
          %s255 = ssub.s32 256, 256
          %256 = vsyncadd %s247, %s255
          %s257 = smul.addr %s47, 2
          %s258 = sadd.s32 %s48, %s257
          %s259 = smul.addr %s258, 128
          %s260 = scalar_lea.hbm %s6, %s259
          %s261 = sshll.u32 %s250, 4
          %s262 = int_to_ptr.vmem [resolvable:$true] %s261
          %267 = dma.vmem_to_hbm [thread:$0]  %s262, 256, %s260, %s247, 128, 128, 8
        $region32: #{tpu_custom_call.1} parent=23 // pred_fallthru
          _
      $region24: #{tpu_custom_call.1} parent=5 // pred_fallthru
        _
      %p268 = scmp.le.s32.totalorder 2, %s38
      // Predicated region
      $region33: #{tpu_custom_call.1} parent=5 // pred_check
        %p269 = pneg %p268
      $region34: #{tpu_custom_call.1} parent=5 // pred_check_branch
        %271 = sbr.rel (%p269) target = $region36
      $region35: #{tpu_custom_call.1} parent=5 // pred_region
        %s272 = ssub.s32 %s38, 2
        // Predicated region
        $region37: #{tpu_custom_call.1} parent=35 // pred_check
          %p273 = pneg %p109
        $region38: #{tpu_custom_call.1} parent=35 // pred_check_branch
          %275 = sbr.rel (%p273) target = $region40
        $region39: #{tpu_custom_call.1} parent=35 // pred_region
          %s276 = sand.u32 %s94, 1
          %s277 = scalar_lea.sflag [#allocation10], %s276
          %s278 = sand.u32 %s94, 1
          %s279 = smul.addr %s278, 16
          %s280 = scalar_lea.vmem [#allocation11], %s279
          %281 = dma.done %s277, 256
        $region40: #{tpu_custom_call.1} parent=35 // pred_fallthru
          _
      $region36: #{tpu_custom_call.1} parent=5 // pred_fallthru
        _
    $region6: #{tpu_custom_call.1} parent=1 // loop_footer
      %s42 = sadd.s32 1, %s38
    $region7: #{tpu_custom_call.1} parent=1 // loop_footer_branch
      %37 = sbr.rel target = $region3
    $region8: #{tpu_custom_call.1} parent=1 // loop_exit
      _
    %282 = vsyncpa [#allocation9], 1
    %s283 = scalar_lea.sflag [#allocation9], 1
    %284 = vsyncpa %s283, 1
    %285 = vsyncpa [#allocation10], 1
    %s286 = scalar_lea.sflag [#allocation10], 1
    %287 = vsyncpa %s286, 1

</llo_original>
